<compile_context>
chip_gen: v7x
topology: tpu7x:2x2x1
jax: 0.10.0
libtpu: 0.0.40
codegen_flags: <defaults>
</compile_context>

<pallas_src>
import functools

import jax
import jax.numpy as jnp
from jax.experimental import pallas as pl
from jax.experimental.pallas import tpu as pltpu


# ---------------------------------------------------------------------------
# Kernel 1: fused src/dst projections for all 4 convs (one MXU matmul)
# ---------------------------------------------------------------------------
def _fused_proj_kernel(x_ref, w_ref, b_ref, src_ref, dst_ref):
    # x: (N, F_in); w: (F_in, 8*H*Dh); b: (1, 8*H*Dh)
    p = jnp.dot(x_ref[...], w_ref[...], preferred_element_type=jnp.float32)
    p = p + b_ref[...]
    half = src_ref.shape[1]                       # 4*H*Dh (= 128)
    src_ref[...] = p[:, :half]                    # [src1|src2|src3|src4]
    dst_ref[...] = p[:, half:]                    # [dst1|dst2|dst3|dst4]


def pallas_fused_projection(x, w_all, b_all):
    n = x.shape[0]
    half = w_all.shape[1] // 2
    return pl.pallas_call(
        _fused_proj_kernel,
        out_shape=(jax.ShapeDtypeStruct((n, half), jnp.float32),
                   jax.ShapeDtypeStruct((n, half), jnp.float32)),
    )(x, w_all, b_all)


# ---------------------------------------------------------------------------
# Kernel 2: 4 convs x 16 heads GATv2 attention + head concat + fuse Linear
# ---------------------------------------------------------------------------
def _attn_fuse_kernel(att_ref,      # SMEM (4, H*Dh) attention vectors
                      hd_ref,       # (TQ, 4*H*Dh)   query (dst) projections
                      hs_ref,       # (N,  4*H*Dh)   key (src) projections
                      hst_ref,      # (4*H*Dh, N)    keys, feature-major
                      adj_ref,      # (4, TQ, N)     additive masks (0 / -1e9)
                      eb_ref,       # (H, TQ, N)     conv1 per-head edge bias
                      wf_ref,       # (4*H*Dh, D)    fuse weight
                      const_ref,    # (1, D)         fuse bias + folded GAT biases
                      o_ref,        # (TQ, D)
                      *, nconv, heads, dh):
    hd_all = heads * dh
    tq, d = o_ref.shape
    hd = hd_ref[...]
    hs = hs_ref[...]
    hst = hst_ref[...]
    acc = jnp.zeros((tq, d), jnp.float32)

    for c in range(nconv):                         # unrolled: 4 convs
        adj_c = adj_ref[c]                         # (TQ, N)
        ctx = []
        for h in range(heads):                     # unrolled: 16 heads
            base = c * hd_all + h * dh
            logits = adj_c
            if c == 0:                             # only conv1 has edge features
                logits = logits + eb_ref[h]
            for k in range(dh):                    # unrolled: Dh = 2
                f = base + k
                # lane-dense pairwise term: (TQ,1) + (1,N) -> (TQ,N)
                z = hd[:, f:f + 1] + hst[f:f + 1, :]
                z = jnp.maximum(z, 0.2 * z)        # LeakyReLU(0.2)
                logits = logits + att_ref[c, h * dh + k] * z
            # softmax over neighbours j (lane axis)
            m = jnp.max(logits, axis=-1, keepdims=True)
            p = jnp.exp(logits - m)
            s = jnp.sum(p, axis=-1, keepdims=True)
            alpha = p * pl.reciprocal(s, approx=True)
            ctx.append(jnp.dot(alpha, hs[:, base:base + dh],
                               preferred_element_type=jnp.float32))
        ctx_c = jnp.concatenate(ctx, axis=-1)      # (TQ, H*Dh) head concat
        # fuse Linear folded in: acc += x_c @ fuse_w[c*H*Dh:(c+1)*H*Dh]
        acc = acc + jnp.dot(ctx_c, wf_ref[c * hd_all:(c + 1) * hd_all, :],
                            preferred_element_type=jnp.float32)

    o_ref[...] = acc + const_ref[...]


def pallas_attn_fuse(att_all, dst, src, src_t, adj_all, ebias, fuse_w, const,
                     *, heads, dh, tq):
    n, hd4 = src.shape
    nconv = adj_all.shape[0]
    d = fuse_w.shape[1]
    kernel = functools.partial(_attn_fuse_kernel, nconv=nconv, heads=heads,
                               dh=dh)
    return pl.pallas_call(
        kernel,
        out_shape=jax.ShapeDtypeStruct((n, d), jnp.float32),
        grid=(n // tq,),
        in_specs=[
            pl.BlockSpec(memory_space=pltpu.MemorySpace.SMEM),   # att vectors
            pl.BlockSpec((tq, hd4), lambda i: (i, 0)),           # queries (dst)
            pl.BlockSpec((n, hd4), lambda i: (0, 0)),            # keys (src)
            pl.BlockSpec((hd4, n), lambda i: (0, 0)),            # keys, feat-major
            pl.BlockSpec((nconv, tq, n), lambda i: (0, i, 0)),   # adj masks
            pl.BlockSpec((heads, tq, n), lambda i: (0, i, 0)),   # conv1 edge bias
            pl.BlockSpec((hd4, d), lambda i: (0, 0)),            # fuse weight
            pl.BlockSpec((1, d), lambda i: (0, 0)),              # folded biases
        ],
        out_specs=pl.BlockSpec((tq, d), lambda i: (i, 0)),
        compiler_params=pltpu.CompilerParams(
            dimension_semantics=("parallel",)),
    )(att_all, dst, src, src_t, adj_all, ebias, fuse_w, const)


# ---------------------------------------------------------------------------
# Kernel 3: edge MLP (LayerNorm -> ReLU -> Linear) with in-place residual
# ---------------------------------------------------------------------------
def _edge_mlp_kernel(xcat_ref, eattr_ref, g_ref, be_ref, w_ref, b_ref, o_ref):
    x = xcat_ref[...]                               # (E, 2D)
    mu = jnp.mean(x, axis=-1, keepdims=True)
    var = jnp.mean((x - mu) ** 2, axis=-1, keepdims=True)
    xn = (x - mu) * jax.lax.rsqrt(var + 1e-5)
    xn = xn * g_ref[...] + be_ref[...]              # LayerNorm affine
    xn = jnp.maximum(xn, 0.0)                       # ReLU
    o_ref[...] = (eattr_ref[...]
                  + jnp.dot(xn, w_ref[...], preferred_element_type=jnp.float32)
                  + b_ref[...])


def pallas_edge_mlp(ecat, eattr, ln_g, ln_b, w, b):
    return pl.pallas_call(
        _edge_mlp_kernel,
        out_shape=jax.ShapeDtypeStruct(eattr.shape, jnp.float32),
        input_output_aliases={1: 0},                # residual writes in place
    )(ecat, eattr, ln_g, ln_b, w, b)


# ---------------------------------------------------------------------------
# JAX glue: masks, edge-bias scatter, tiling helper
# ---------------------------------------------------------------------------
def _dense_adj_mask(edge_index, n):
    # TODO(synk): for large N, build the mask in-kernel from prefetched
    # edge_index (PrefetchScalarGridSpec) instead of a dense JAX scatter.
    src, dst = edge_index[0], edge_index[1]
    adj = jnp.full((n, n), -1e9, jnp.float32)
    adj = adj.at[dst, src].set(0.0)                 # edges j -> i
    idx = jnp.arange(n)
    return adj.at[idx, idx].set(0.0)                # self-loops


def _pick_tq(n):
    # Largest query-row tile (multiple of 8, dividing N) that still leaves
    # >= 2 grid steps: keeps a "parallel" axis with >= 2 steps so v7x's two
    # TensorCores both get work; neutral on v5e/v6e (1 TC).
    for tq in (256, 128, 64, 32, 16, 8):
        if tq <= n // 2 and n % tq == 0:
            return tq
    return n


# ---------------------------------------------------------------------------
# Parameters (deterministic, synthetic)
# ---------------------------------------------------------------------------
def _winit(key, shape, scale=0.1):
    return scale * jax.random.normal(key, shape, jnp.float32)


def init_node_layer1_params(key, dim_in, dim_out, heads, edge_dim):
    dh = dim_out // heads                    # per-head dim (dim_out // 16)
    hd = heads * dh                          # == dim_out
    ks = jax.random.split(key, 8)
    return {
        "heads": heads,
        "dh": dh,
        # fused projections: columns = [src1|src2|src3|src4|dst1|dst2|dst3|dst4]
        "w_all": _winit(ks[0], (dim_in, 8 * hd)),
        "b_all": jnp.zeros((1, 8 * hd), jnp.float32),
        # per-conv GATv2 attention vectors, (H, Dh) flattened to (H*Dh,)
        "att_all": _winit(ks[1], (4, hd)),
        # per-conv GATConv output biases, concatenated
        "gat_bias_all": _winit(ks[2], (1, 4 * hd)),
        # conv1 edge-feature -> per-head logit bias
        "w_edge": _winit(ks[3], (edge_dim, heads)),
        "b_edge": jnp.zeros((1, heads), jnp.float32),
        # fuse Linear
        "fuse_w": _winit(ks[4], (4 * hd, dim_out)),
        "fuse_b": jnp.zeros((1, dim_out), jnp.float32),
        # edge MLP: LayerNorm(2*dim_out) -> ReLU -> Linear(2*dim_out, dim_out)
        "ln_g": jnp.ones((1, 2 * dim_out), jnp.float32),
        "ln_b": jnp.zeros((1, 2 * dim_out), jnp.float32),
        "emlp_w": _winit(ks[5], (2 * dim_out, dim_out)),
        "emlp_b": jnp.zeros((1, dim_out), jnp.float32),
    }


# ---------------------------------------------------------------------------
# NodeLayer1 forward
# ---------------------------------------------------------------------------
def node_layer1_forward(params, batch):
    fplan, veno = batch
    x = veno["x"]
    n = x.shape[0]
    heads, dh = params["heads"], params["dh"]

    # 1) fused src/dst projections for all 4 convs (one lane-dense Pallas matmul)
    src, dst = pallas_fused_projection(x, params["w_all"], params["b_all"])
    src_t = src.T          # (4*H*Dh, N): keys feature-major for lane-dense scores

    # 2) per-conv adjacency masks (NOT broadcast over heads)
    adj_all = jnp.stack(
        [_dense_adj_mask(veno["edge_index"], n),
         _dense_adj_mask(veno["edge_index_d2"], n),
         _dense_adj_mask(veno["edge_index_d4"], n),
         _dense_adj_mask(veno["edge_index_d8"], n)], axis=0)

    # 3) conv1 per-head edge-feature logit bias (tiny projection + scatter glue)
    e_src, e_dst = veno["edge_index"][0], veno["edge_index"][1]
    eb = jnp.dot(veno["dual_attr"], params["w_edge"]) + params["b_edge"]  # (E, H)
    ebias = jnp.zeros((heads, n, n), jnp.float32).at[:, e_dst, e_src].add(eb.T)

    # 4) per-conv GAT output biases folded with the fuse bias into one constant
    const = params["fuse_b"] + jnp.dot(params["gat_bias_all"], params["fuse_w"])

    # 5) 4 convs x 16 heads attention + head-concat + fuse Linear: one Pallas call
    tq = _pick_tq(n)
    xf = pallas_attn_fuse(params["att_all"], dst, src, src_t, adj_all, ebias,
                          params["fuse_w"], const, heads=heads, dh=dh, tq=tq)

    # 6) edge MLP with residual into edge_attr (aliased in place)
    x_src_e, x_dst_e = xf[e_src], xf[e_dst]                 # gathers (glue)
    ecat = jnp.concatenate([x_src_e, x_dst_e], axis=-1)     # (E, 2D)
    new_edge_attr = pallas_edge_mlp(ecat, veno["edge_attr"], params["ln_g"],
                                    params["ln_b"], params["emlp_w"],
                                    params["emlp_b"])

    veno = dict(veno, x=xf, edge_attr=new_edge_attr)

    # Node2EdgeNaiveReplace: pad edge_attr with a ones row, gather by dual idx.
    ones_pad = jnp.ones((1, new_edge_attr.shape[1]), jnp.float32)
    padded = jnp.concatenate([new_edge_attr, ones_pad], axis=0)
    oemap = fplan["edge_dual_idx"].squeeze()
    fplan = dict(fplan, dual_attr=padded[oemap])

    return fplan, veno


# ---------------------------------------------------------------------------
# Example run
# ---------------------------------------------------------------------------
if __name__ == "__main__":
    DIM_IN = 32          # layer_config.dim_in
    DIM_OUT = 32         # layer_config.dim_out  (per-head dim = 32 // 16 = 2)
    HEADS = 16
    N, E, E_F = 16, 32, 24

    key = jax.random.PRNGKey(0)
    keys = jax.random.split(key, 16)

    x = jax.random.normal(keys[0], (N, DIM_IN), jnp.float32)

    def rand_edges(k):
        return jax.random.randint(k, (2, E), 0, N)

    veno = {
        "x": x,
        "edge_index": rand_edges(keys[1]),
        "edge_index_d2": rand_edges(keys[2]),
        "edge_index_d4": rand_edges(keys[3]),
        "edge_index_d8": rand_edges(keys[4]),
        "edge_attr": jax.random.normal(keys[5], (E, DIM_OUT), jnp.float32),
        "dual_attr": jax.random.normal(keys[6], (E, DIM_OUT), jnp.float32),
    }
    fplan = {
        # indices into the padded (E + 1) edge_attr table, E == ones row
        "edge_dual_idx": jax.random.randint(keys[7], (E_F, 1), 0, E + 1),
    }

    params = init_node_layer1_params(keys[8], DIM_IN, DIM_OUT, HEADS,
                                     edge_dim=DIM_OUT)

    fplan_out, veno_out = node_layer1_forward(params, (fplan, veno))
    jax.block_until_ready(
        (fplan_out["dual_attr"], veno_out["x"], veno_out["edge_attr"]))

    assert veno_out["x"].shape == (N, DIM_OUT)
    assert veno_out["edge_attr"].shape == (E, DIM_OUT)
    assert fplan_out["dual_attr"].shape == (E_F, DIM_OUT)
    print("KERNEL_OK")
</pallas_src>

<mosaic_0001>
module attributes {stable_mosaic.version = 11 : i64} {
  func.func @_fused_proj_kernel(%arg0: memref<16x32xf32, #tpu.memory_space<vmem>>, %arg1: memref<32x256xf32, #tpu.memory_space<vmem>>, %arg2: memref<1x256xf32, #tpu.memory_space<vmem>>, %arg3: memref<16x128xf32, #tpu.memory_space<vmem>>, %arg4: memref<16x128xf32, #tpu.memory_space<vmem>>) attributes {dimension_semantics = [], scalar_prefetch = 0 : i64, scratch_operands = 0 : i64, tpu.core_type = #tpu.core_type<tc>} {
    %c0 = arith.constant 0 : index
    %c0_0 = arith.constant 0 : index
    %0 = vector.load %arg0[%c0, %c0_0] : memref<16x32xf32, #tpu.memory_space<vmem>>, vector<16x32xf32>
    %c0_1 = arith.constant 0 : index
    %c0_2 = arith.constant 0 : index
    %1 = vector.load %arg1[%c0_1, %c0_2] : memref<32x256xf32, #tpu.memory_space<vmem>>, vector<32x256xf32>
    %cst = arith.constant dense<0.000000e+00> : vector<16x256xf32>
    %2 = tpu.matmul %0, %1, %cst {dimension_numbers = #tpu.dot_dimension_numbers<[1], [0], [0], [1], [0, 0, 1, 1], [], []>} : vector<16x32xf32>, vector<32x256xf32>, vector<16x256xf32> -> vector<16x256xf32>
    %c0_3 = arith.constant 0 : index
    %c0_4 = arith.constant 0 : index
    %3 = vector.load %arg2[%c0_3, %c0_4] : memref<1x256xf32, #tpu.memory_space<vmem>>, vector<1x256xf32>
    %4 = vector.broadcast %3 : vector<1x256xf32> to vector<16x256xf32>
    %5 = arith.addf %2, %4 : vector<16x256xf32>
    %6 = vector.extract_strided_slice %5 {offsets = [0, 0], sizes = [16, 128], strides = [1, 1]} : vector<16x256xf32> to vector<16x128xf32>
    %c0_5 = arith.constant 0 : index
    %c0_6 = arith.constant 0 : index
    %7 = vector.load %arg3[%c0_5, %c0_6] : memref<16x128xf32, #tpu.memory_space<vmem>>, vector<16x128xf32>
    tpu.vector_store %arg3[%c0_5, %c0_6], %6 {strides = array<i32>} : memref<16x128xf32, #tpu.memory_space<vmem>>, vector<16x128xf32>,
    %8 = vector.extract_strided_slice %5 {offsets = [0, 128], sizes = [16, 128], strides = [1, 1]} : vector<16x256xf32> to vector<16x128xf32>
    %c0_7 = arith.constant 0 : index
    %c0_8 = arith.constant 0 : index
    %9 = vector.load %arg4[%c0_7, %c0_8] : memref<16x128xf32, #tpu.memory_space<vmem>>, vector<16x128xf32>
    tpu.vector_store %arg4[%c0_7, %c0_8], %8 {strides = array<i32>} : memref<16x128xf32, #tpu.memory_space<vmem>>, vector<16x128xf32>,
    return
  }
}

</mosaic_0001>

<llo_original>
// kernel: tpu_custom_call.1
$region0: #{tpu_custom_call.1}
  #allocation0 [shape = 'u32[]', space=smem, size = 0x4, offset = 0x4, fixed_abs, tag = 'smem constant byte address 0x4 - core index']
  #allocation1 [shape = 'u32[144,128]{1,0:T(1,128)}', space=vmem, size = 0x12000, scoped, tag = 'internal scratch']
  %s0 = inlined_call_operand.hbm [shape: f32[16,32], index: 0, kind: input, shape index: {}]
  %s1 = inlined_call_operand.hbm [shape: f32[32,256], index: 1, kind: input, shape index: {}]
  %s2 = inlined_call_operand.vmem [shape: f32[1,256], index: 2, kind: input, shape index: {}]
  %s3 = inlined_call_operand.hbm [shape: f32[16,128], index: 3, kind: output, shape index: {0}]
  %s4 = inlined_call_operand.hbm [shape: f32[16,128], index: 4, kind: output, shape index: {1}]
  %5 = xla_tuple %s3, %s4
  %s6 = sld [smem:[#allocation0]]
  $region38: #{tpu_custom_call.1} parent=0
    _
  %s8 = ssub.s32 1, %s6
  %s9 = scalar_select 0, %s8, %s6
  $region1: #{tpu_custom_call.1} parent=0
    #allocation2 [shape = 'u8[8192]{0}', space=vmem, size = 0x2000, scoped, tag = 'input window, operand 0, single buffered']
    #allocation3 [shape = 's32[1]{0}', space=sflag, size = 0x4, scoped, tag = 'scoped memory for tpu_custom_call.1']
    #allocation4 [shape = 's32[1]{0}', space=sflag, size = 0x4, scoped, tag = 'scoped memory for tpu_custom_call.1']
    #allocation5 [shape = 'u8[32768]{0}', space=vmem, size = 0x8000, scoped, tag = 'input window, operand 1, single buffered']
    #allocation6 [shape = 's32[1]{0}', space=sflag, size = 0x4, scoped, tag = 'scoped memory for tpu_custom_call.1']
    #allocation7 [shape = 'u8[8192]{0}', space=vmem, size = 0x2000, scoped, tag = 'output window, operand 0, single buffered']
    #allocation8 [shape = 'u8[8192]{0}', space=vmem, size = 0x2000, scoped, tag = 'output window, operand 1, single buffered']
    #allocation9 [shape = 's32[1]{0}', space=sflag, size = 0x4, scoped, tag = 'scoped memory for tpu_custom_call.1']
    %10 = vsyncpa [#allocation3], 0
    %11 = vsyncpa [#allocation6], 0
    %12 = vsyncpa [#allocation4], 0
    %13 = vsyncpa [#allocation9], 0
    // Predicated region
    $region2: #{tpu_custom_call.1} parent=1 // pred_check
      _
    $region3: #{tpu_custom_call.1} parent=1 // pred_check_branch
      %15 = sbr.rel (0) target = $region5
    $region4: #{tpu_custom_call.1} parent=1 // pred_region
      %s17 = ssub.s32 256, 256
      %18 = vsyncadd [#allocation3], %s17
      %s19 = sshll.u32 [#allocation2], 4
      %s20 = int_to_ptr.vmem [resolvable:$true] %s19
      %25 = dma.hbm_to_vmem [thread:$0]  %s0, 256, %s20, [#allocation3], 128, 128, 8
    $region5: #{tpu_custom_call.1} parent=1 // pred_fallthru
      _
    // Predicated region
    $region6: #{tpu_custom_call.1} parent=1 // pred_check
      _
    $region7: #{tpu_custom_call.1} parent=1 // pred_check_branch
      %27 = sbr.rel (0) target = $region9
    $region8: #{tpu_custom_call.1} parent=1 // pred_region
      %s29 = ssub.s32 1024, 1024
      %30 = vsyncadd [#allocation6], %s29
      %s31 = sshll.u32 [#allocation5], 4
      %s32 = int_to_ptr.vmem [resolvable:$true] %s31
      %37 = dma.hbm_to_vmem [thread:$0]  %s1, 1024, %s32, [#allocation6], 256, 256, 16
    $region9: #{tpu_custom_call.1} parent=1 // pred_fallthru
      _
    // Predicated region
    $region10: #{tpu_custom_call.1} parent=1 // pred_check
      _
    $region11: #{tpu_custom_call.1} parent=1 // pred_check_branch
      %39 = sbr.rel (0) target = $region13
    $region12: #{tpu_custom_call.1} parent=1 // pred_region
      _
    $region13: #{tpu_custom_call.1} parent=1 // pred_fallthru
      _
    // Predicated region
    $region14: #{tpu_custom_call.1} parent=1 // pred_check
      _
    $region15: #{tpu_custom_call.1} parent=1 // pred_check_branch
      %41 = sbr.rel (0) target = $region17
    $region16: #{tpu_custom_call.1} parent=1 // pred_region
      %42 = dma.done [#allocation3], 256
    $region17: #{tpu_custom_call.1} parent=1 // pred_fallthru
      _
    // Predicated region
    $region18: #{tpu_custom_call.1} parent=1 // pred_check
      _
    $region19: #{tpu_custom_call.1} parent=1 // pred_check_branch
      %44 = sbr.rel (0) target = $region21
    $region20: #{tpu_custom_call.1} parent=1 // pred_region
      %45 = dma.done [#allocation6], 1024
    $region21: #{tpu_custom_call.1} parent=1 // pred_fallthru
      _
    %v46 = vld [vmem:[#allocation2] sm:$0xff]
    %v47 = vld [vmem:[#allocation2 + $0x8] sm:$0xff]
    %v48 = vld [vmem:[#allocation5] sm:$0xff]
    %v49 = vld [vmem:[#allocation5 + $0x8] sm:$0xff]
    %v50 = vld [vmem:[#allocation5 + $0x10] sm:$0xff]
    %v51 = vld [vmem:[#allocation5 + $0x18] sm:$0xff]
    %v52 = vld [vmem:[#allocation5 + $0x20] sm:$0xff]
    %v53 = vld [vmem:[#allocation5 + $0x28] sm:$0xff]
    %v54 = vld [vmem:[#allocation5 + $0x30] sm:$0xff]
    %v55 = vld [vmem:[#allocation5 + $0x38] sm:$0xff]
    %v56 = vld [vmem:[%s2] sm:$0x3]
    %v58 = vlaneseq
    %v59 = vshrl.u32 %v58, 7
    %v60 = vsub.s32 0, %v59
    %v61 = vrot.slane %v56, %v60
    %v62 = vlaneseq
    %v63 = vshrl.u32 %v62, 7
    %v64 = vsub.s32 1, %v63
    %v65 = vrot.slane %v56, %v64
    %vm68 = vcmask 261120
    %v70 = vsel %vm68, %v46, 0
    %v73 = vsel %vm68, %v47, 0
    %75 = vmatprep.subr.mxu0 %v49
    %76 = vmatpush1.msra.mxu0 %v48
    %77 = vmatprep.subr.mxu0 %v51
    %78 = vmatpush1.msra.mxu0 %v50
    %79 = vmatprep.subr.mxu0 %v53
    %80 = vmatpush1.msra.mxu0 %v52
    %81 = vmatprep.subr.mxu0 %v55
    %82 = vmatpush1.msra.mxu0 %v54
    %83 = vmatprep.subr.mxu0 0.0
    %84 = vmatpush1.msra.mxu0 0.0
    %85 = vmatprep.subr.mxu0 0.0
    %86 = vmatpush1.msra.mxu0 0.0
    %87 = vmatprep.subr.mxu0 0.0
    %88 = vmatpush1.msra.mxu0 0.0
    %89 = vmatprep.subr.mxu0 0.0
    %90 = vmatpush1.msra.mxu0 0.0
    %91 = vmatprep.subr.mxu0 0.0
    %92 = vmatpush1.msra.mxu0 0.0
    %93 = vmatprep.subr.mxu0 0.0
    %94 = vmatpush1.msra.mxu0 0.0
    %95 = vmatprep.subr.mxu0 0.0
    %96 = vmatpush1.msra.mxu0 0.0
    %97 = vmatprep.subr.mxu0 0.0
    %98 = vmatpush1.msra.mxu0 0.0
    %99 = vmatprep.subr.mxu0 0.0
    %100 = vmatpush1.msra.mxu0 0.0
    %101 = vmatprep.subr.mxu0 0.0
    %102 = vmatpush1.msra.mxu0 0.0
    %103 = vmatprep.subr.mxu0 0.0
    %104 = vmatpush1.msra.mxu0 0.0
    %105 = vmatprep.subr.mxu0 0.0
    %106 = vmatpush1.msra.mxu0 0.0
    %107 = vmatprep.subr.mxu0 0.0
    %108 = vmatpush1.msra.mxu0 0.0
    %109 = vmatprep.subr.mxu0 0.0
    %110 = vmatpush1.msra.mxu0 0.0
    %111 = vmatprep.subr.mxu0 0.0
    %112 = vmatpush1.msra.mxu0 0.0
    %113 = vmatprep.subr.mxu0 0.0
    %114 = vmatpush1.msra.mxu0 0.0
    %115 = vmatprep.subr.mxu0 0.0
    %116 = vmatpush1.msra.mxu0 0.0
    %117 = vmatprep.subr.mxu0 0.0
    %118 = vmatpush1.msra.mxu0 0.0
    %119 = vmatprep.subr.mxu0 0.0
    %120 = vmatpush1.msra.mxu0 0.0
    %121 = vmatprep.subr.mxu0 0.0
    %122 = vmatpush1.msra.mxu0 0.0
    %123 = vmatprep.subr.mxu0 0.0
    %124 = vmatpush1.msra.mxu0 0.0
    %125 = vmatprep.subr.mxu0 0.0
    %126 = vmatpush1.msra.mxu0 0.0
    %127 = vmatprep.subr.mxu0 0.0
    %128 = vmatpush1.msra.mxu0 0.0
    %129 = vmatprep.subr.mxu0 0.0
    %130 = vmatpush1.msra.mxu0 0.0
    %131 = vmatprep.subr.mxu0 0.0
    %132 = vmatpush1.msra.mxu0 0.0
    %133 = vmatprep.subr.mxu0 0.0
    %134 = vmatpush1.msra.mxu0 0.0
    %135 = vmatprep.subr.mxu0 0.0
    %136 = vmatpush1.msra.mxu0 0.0
    %137 = vmatprep.subr.mxu0 0.0
    %138 = vmatpush1.msra.mxu0 0.0
    %139 = vmatprep.mubr.f32.mxu0 0.0
    %140 = vmatmul.mubr.f32.gmra.mrb[0].mxu0 %v70
    %v141 = vpop.f32.mrb[0].mxu0
    %v142 = vadd.f32 %v61, %v141
    %v143 = vpop.f32.mrb[0].mxu0
    %v144 = vadd.f32 %v65, %v143
    %145 = vmatprep.mubr.f32.mxu0 0.0
    %146 = vmatmul.mubr.f32.gmra.mrb[0].mxu0 %v73
    %v147 = vpop.f32.mrb[0].mxu0
    %v148 = vadd.f32 %v61, %v147
    %v149 = vpop.f32.mrb[0].mxu0
    %v150 = vadd.f32 %v65, %v149
    %151 = vdwg.mxu0
    %152 = vst [vmem:[#allocation7] sm:$0xff] %v142
    %153 = vst [vmem:[#allocation7 + $0x8] sm:$0xff] %v148
    %154 = vst [vmem:[#allocation8] sm:$0xff] %v144
    %155 = vst [vmem:[#allocation8 + $0x8] sm:$0xff] %v150
    // Predicated region
    $region22: #{tpu_custom_call.1} parent=1 // pred_check
      _
    $region23: #{tpu_custom_call.1} parent=1 // pred_check_branch
      %157 = sbr.rel (0) target = $region25
    $region24: #{tpu_custom_call.1} parent=1 // pred_region
      %s159 = ssub.s32 256, 256
      %160 = vsyncadd [#allocation4], %s159
      %s161 = sshll.u32 [#allocation7], 4
      %s162 = int_to_ptr.vmem [resolvable:$true] %s161
      %167 = dma.vmem_to_hbm [thread:$0]  %s162, 256, %s3, [#allocation4], 128, 128, 8
    $region25: #{tpu_custom_call.1} parent=1 // pred_fallthru
      _
    // Predicated region
    $region26: #{tpu_custom_call.1} parent=1 // pred_check
      _
    $region27: #{tpu_custom_call.1} parent=1 // pred_check_branch
      %169 = sbr.rel (0) target = $region29
    $region28: #{tpu_custom_call.1} parent=1 // pred_region
      %s171 = ssub.s32 256, 256
      %172 = vsyncadd [#allocation9], %s171
      %s173 = sshll.u32 [#allocation8], 4
      %s174 = int_to_ptr.vmem [resolvable:$true] %s173
      %179 = dma.vmem_to_hbm [thread:$0]  %s174, 256, %s4, [#allocation9], 128, 128, 8
    $region29: #{tpu_custom_call.1} parent=1 // pred_fallthru
      _
    // Predicated region
    $region30: #{tpu_custom_call.1} parent=1 // pred_check
      _
    $region31: #{tpu_custom_call.1} parent=1 // pred_check_branch
      %181 = sbr.rel (0) target = $region33
    $region32: #{tpu_custom_call.1} parent=1 // pred_region
      %182 = dma.done [#allocation4], 256
    $region33: #{tpu_custom_call.1} parent=1 // pred_fallthru
      _
    // Predicated region
    $region34: #{tpu_custom_call.1} parent=1 // pred_check
      _
    $region35: #{tpu_custom_call.1} parent=1 // pred_check_branch
      %184 = sbr.rel (0) target = $region37
    $region36: #{tpu_custom_call.1} parent=1 // pred_region
      %185 = dma.done [#allocation9], 256
    $region37: #{tpu_custom_call.1} parent=1 // pred_fallthru
      _
    %186 = vsyncpa [#allocation3], 1
    %187 = vsyncpa [#allocation6], 1
    %188 = vsyncpa [#allocation4], 1
    %189 = vsyncpa [#allocation9], 1

</llo_original>
